<compile_context>
chip_gen: v7x
topology: tpu7x:2x2x1
jax: 0.10.0
libtpu: 0.0.40
codegen_flags: <defaults>
</compile_context>

<pallas_src>
import jax
import jax.numpy as jnp
from jax.experimental import pallas as pl
from jax.experimental.pallas import tpu as pltpu


# ----------------------------------------------------------------------------
# Stage 1: per-sample channel gate (tiny; computed once per call).
# ----------------------------------------------------------------------------
def _gate_kernel(xse_ref, w1_ref, b1_ref, w2_ref, b2_ref, gate_ref):
    # xse_ref: (N, C)          squeezed descriptor
    # w1_ref:  (C, C_mid)      conv_reduce weight, pre-transposed (C_in, C_out)
    # b1_ref:  (1, C_mid)
    # w2_ref:  (C_mid, C)      conv_expand weight, pre-transposed (C_in, C_out)
    # b2_ref:  (1, C)
    # gate_ref:(N, C)          sigmoid gate, f32
    se = xse_ref[...].astype(jnp.float32)
    y = jnp.dot(se, w1_ref[...], preferred_element_type=jnp.float32) + b1_ref[...]
    y = jnp.maximum(y, 0.0)
    z = jnp.dot(y, w2_ref[...], preferred_element_type=jnp.float32) + b2_ref[...]
    gate_ref[...] = jax.nn.sigmoid(z)


# ----------------------------------------------------------------------------
# Stage 2: stream x through VMEM and apply the gate (pure HBM-bound multiply).
# ----------------------------------------------------------------------------
def _apply_gate_kernel(gate_ref, x_ref, o_ref):
    # gate_ref: (1, C, 1)   -- C on sublanes: broadcast over lanes is a splat.
    # x_ref:    (1, C, T_HW) lane-dense input tile
    # o_ref:    (1, C, T_HW) output tile
    # Multiply is done in x's dtype: bf16 halves HBM traffic everywhere (on
    # v5e the VPU upconverts per vreg, but HBM is the binding resource there).
    o_ref[...] = x_ref[...] * gate_ref[...]


def _vmem_capacity_bytes():
    """Chip VMEM capacity; conservative 64 MiB fallback (works on all gens)."""
    try:
        info = pltpu.get_tpu_info()
        for attr in ("vmem_capacity_bytes", "vmem_bytes"):
            cap = getattr(info, attr, None)
            if cap:
                return int(cap)
    except Exception:
        pass
    return 64 << 20


def _pick_tile_hw(hw, c, itemsize, budget_bytes):
    """Largest lane-dense (multiple-of-128) HW tile such that ~5 live tiles
    (double-buffered x, double-buffered out, + Mosaic internal slack) fit in
    the chip-derived VMEM budget.  Ragged HW is handled by a cdiv grid with a
    masked final tile -- never by one giant full-HW block."""
    if hw <= 128:
        return hw  # block == full array dim is always legal and tiny.
    per_tile = max(1, budget_bytes // 5)
    max_lanes = max(128, (per_tile // max(1, c * itemsize)) // 128 * 128)
    hw_aligned = (hw // 128) * 128
    return max(128, min(hw_aligned, max_lanes))


def se_layer(x, x_se, w1, b1, w2, b2):
    """x: (N, C, H, W), x_se: (N, C, 1, 1),
    w1: (C_mid, C, 1, 1), b1: (C_mid,), w2: (C, C_mid, 1, 1), b2: (C,)
    -> (N, C, H, W)."""
    N, C, H, W = x.shape
    C_mid = w1.shape[0]
    assert x_se.shape == (N, C, 1, 1)
    assert w1.shape[:2] == (C_mid, C) and w2.shape[:2] == (C, C_mid)
    HW = H * W
    itemsize = jnp.dtype(x.dtype).itemsize

    # ~75% of physical VMEM: ~96 MiB on v5e/v6e (128 MiB), ~48 MiB on v7x (64).
    budget = int(_vmem_capacity_bytes() * 3 // 4)

    # --- Stage 1: gate, computed once (NOT once per HW tile). -----------------
    gate2d = pl.pallas_call(
        _gate_kernel,
        out_shape=jax.ShapeDtypeStruct((N, C), jnp.float32),
        compiler_params=pltpu.CompilerParams(vmem_limit_bytes=budget),
    )(
        x_se.reshape(N, C),
        w1.reshape(C_mid, C).T,   # (C, C_mid): no in-kernel transpose
        b1.reshape(1, C_mid),
        w2.reshape(C, C_mid).T,   # (C_mid, C)
        b2.reshape(1, C),
    )
    # (N, C, 1): C on sublanes so the lane broadcast in the streamer is free.
    gate = gate2d.astype(x.dtype).reshape(N, C, 1)

    # --- Stage 2: streaming gate multiply over (N, C, HW). --------------------
    t_hw = _pick_tile_hw(HW, C, itemsize, budget)
    grid = (N, pl.cdiv(HW, t_hw))
    x_flat = x.reshape(N, C, HW)

    in_specs = [
        pl.BlockSpec((1, C, 1), lambda n, t: (n, 0, 0)),       # gate (per sample)
        pl.BlockSpec((1, C, t_hw), lambda n, t: (n, 0, t)),    # x tile
        # NOTE: pipeline_mode=pl.Buffered(3) on x/out is a candidate few-% win
        # for this pure streamer; left at the default pending measurement.
    ]
    out_specs = pl.BlockSpec((1, C, t_hw), lambda n, t: (n, 0, t))

    cost = pl.CostEstimate(
        flops=int(N * C * HW),
        transcendentals=0,
        bytes_accessed=int(2 * N * C * HW * itemsize + N * C * itemsize),
    )

    out = pl.pallas_call(
        _apply_gate_kernel,
        out_shape=jax.ShapeDtypeStruct((N, C, HW), x.dtype),
        grid=grid,
        in_specs=in_specs,
        out_specs=out_specs,
        compiler_params=pltpu.CompilerParams(
            dimension_semantics=("parallel", "parallel"),
            vmem_limit_bytes=budget,
        ),
        cost_estimate=cost,
    )(gate, x_flat)
    return out.reshape(N, C, H, W)


def se_layer_ref(x, x_se, w1, b1, w2, b2):
    """Pure-JAX reference mirroring the PyTorch module."""
    N, C, H, W = x.shape
    C_mid = w1.shape[0]
    se = x_se.reshape(N, C).astype(jnp.float32)
    y = jnp.maximum(se @ w1.reshape(C_mid, C).T.astype(jnp.float32) + b1, 0.0)
    z = y @ w2.reshape(C, C_mid).T.astype(jnp.float32) + b2
    gate = jax.nn.sigmoid(z).astype(x.dtype).reshape(N, C, 1, 1)
    return x * gate


if __name__ == "__main__":
    key = jax.random.PRNGKey(0)
    k_x, k_se, k_w1, k_b1, k_w2, k_b2, k_x2, k_se2 = jax.random.split(key, 8)

    # Test 1: SE block with channel reduction (C -> C/2 -> C), HW % 128 == 0.
    N, C, C_mid, H, W = 2, 8, 4, 16, 16
    x = jax.random.normal(k_x, (N, C, H, W), dtype=jnp.float32)
    x_se = jax.random.normal(k_se, (N, C, 1, 1), dtype=jnp.float32)
    w1 = jax.random.normal(k_w1, (C_mid, C, 1, 1), dtype=jnp.float32) * 0.1
    b1 = jax.random.normal(k_b1, (C_mid,), dtype=jnp.float32) * 0.1
    w2 = jax.random.normal(k_w2, (C, C_mid, 1, 1), dtype=jnp.float32) * 0.1
    b2 = jax.random.normal(k_b2, (C,), dtype=jnp.float32) * 0.1

    out = jax.block_until_ready(se_layer(x, x_se, w1, b1, w2, b2))
    ref = se_layer_ref(x, x_se, w1, b1, w2, b2)
    assert out.shape == (N, C, H, W)
    assert jnp.allclose(out, ref, atol=1e-5, rtol=1e-5)

    # Test 2: ragged spatial extent (H*W = 400, not a multiple of 128) ->
    # exercises the cdiv grid + masked final tile path.
    H2, W2 = 20, 20
    x2 = jax.random.normal(k_x2, (1, C, H2, W2), dtype=jnp.float32)
    x_se2 = jax.random.normal(k_se2, (1, C, 1, 1), dtype=jnp.float32)
    out2 = jax.block_until_ready(se_layer(x2, x_se2, w1, b1, w2, b2))
    ref2 = se_layer_ref(x2, x_se2, w1, b1, w2, b2)
    assert out2.shape == (1, C, H2, W2)
    assert jnp.allclose(out2, ref2, atol=1e-5, rtol=1e-5)

    print("KERNEL_OK")
</pallas_src>

<mosaic_0001>
module attributes {stable_mosaic.version = 11 : i64} {
  func.func @_gate_kernel(%arg0: memref<2x8xf32, #tpu.memory_space<vmem>>, %arg1: memref<8x4xf32, #tpu.memory_space<vmem>>, %arg2: memref<1x4xf32, #tpu.memory_space<vmem>>, %arg3: memref<4x8xf32, #tpu.memory_space<vmem>>, %arg4: memref<1x8xf32, #tpu.memory_space<vmem>>, %arg5: memref<2x8xf32, #tpu.memory_space<vmem>>) attributes {dimension_semantics = [], scalar_prefetch = 0 : i64, scratch_operands = 0 : i64, tpu.core_type = #tpu.core_type<tc>} {
    %c0 = arith.constant 0 : index
    %c0_0 = arith.constant 0 : index
    %0 = vector.load %arg0[%c0, %c0_0] : memref<2x8xf32, #tpu.memory_space<vmem>>, vector<2x8xf32>
    %c0_1 = arith.constant 0 : index
    %c0_2 = arith.constant 0 : index
    %1 = vector.load %arg1[%c0_1, %c0_2] : memref<8x4xf32, #tpu.memory_space<vmem>>, vector<8x4xf32>
    %cst = arith.constant dense<0.000000e+00> : vector<2x4xf32>
    %2 = tpu.matmul %0, %1, %cst {dimension_numbers = #tpu.dot_dimension_numbers<[1], [0], [0], [1], [0, 0, 1, 1], [], []>} : vector<2x8xf32>, vector<8x4xf32>, vector<2x4xf32> -> vector<2x4xf32>
    %c0_3 = arith.constant 0 : index
    %c0_4 = arith.constant 0 : index
    %3 = vector.load %arg2[%c0_3, %c0_4] : memref<1x4xf32, #tpu.memory_space<vmem>>, vector<1x4xf32>
    %4 = vector.broadcast %3 : vector<1x4xf32> to vector<2x4xf32>
    %5 = arith.addf %2, %4 : vector<2x4xf32>
    %cst_5 = arith.constant 0.000000e+00 : f32
    %6 = vector.broadcast %cst_5 : f32 to vector<2x4xf32>
    %7 = arith.maximumf %5, %6 : vector<2x4xf32>
    %c0_6 = arith.constant 0 : index
    %c0_7 = arith.constant 0 : index
    %8 = vector.load %arg3[%c0_6, %c0_7] : memref<4x8xf32, #tpu.memory_space<vmem>>, vector<4x8xf32>
    %cst_8 = arith.constant dense<0.000000e+00> : vector<2x8xf32>
    %9 = tpu.matmul %7, %8, %cst_8 {dimension_numbers = #tpu.dot_dimension_numbers<[1], [0], [0], [1], [0, 0, 1, 1], [], []>} : vector<2x4xf32>, vector<4x8xf32>, vector<2x8xf32> -> vector<2x8xf32>
    %c0_9 = arith.constant 0 : index
    %c0_10 = arith.constant 0 : index
    %10 = vector.load %arg4[%c0_9, %c0_10] : memref<1x8xf32, #tpu.memory_space<vmem>>, vector<1x8xf32>
    %11 = vector.broadcast %10 : vector<1x8xf32> to vector<2x8xf32>
    %12 = arith.addf %9, %11 : vector<2x8xf32>
    %13 = arith.negf %12 : vector<2x8xf32>
    %14 = math.exp %13 : vector<2x8xf32>
    %cst_11 = arith.constant 1.000000e+00 : f32
    %15 = vector.broadcast %cst_11 : f32 to vector<2x8xf32>
    %16 = arith.addf %15, %14 : vector<2x8xf32>
    %17 = arith.divf %15, %16 : vector<2x8xf32>
    %c0_12 = arith.constant 0 : index
    %c0_13 = arith.constant 0 : index
    %18 = vector.load %arg5[%c0_12, %c0_13] : memref<2x8xf32, #tpu.memory_space<vmem>>, vector<2x8xf32>
    tpu.vector_store %arg5[%c0_12, %c0_13], %17 {strides = array<i32>} : memref<2x8xf32, #tpu.memory_space<vmem>>, vector<2x8xf32>,
    return
  }
}

</mosaic_0001>

<llo_original>
// kernel: tpu_custom_call.1
$region0: #{tpu_custom_call.1}
  #allocation0 [shape = 'u32[]', space=smem, size = 0x4, offset = 0x4, fixed_abs, tag = 'smem constant byte address 0x4 - core index']
  #allocation1 [shape = 'u32[144,128]{1,0:T(1,128)}', space=vmem, size = 0x12000, scoped, tag = 'internal scratch']
  %s0 = inlined_call_operand.vmem [shape: f32[2,8], index: 0, kind: input, shape index: {}]
  %s1 = inlined_call_operand.vmem [shape: f32[8,4], index: 1, kind: input, shape index: {}]
  %s2 = inlined_call_operand.vmem [shape: f32[1,4], index: 2, kind: input, shape index: {}]
  %s3 = inlined_call_operand.vmem [shape: f32[4,8], index: 3, kind: input, shape index: {}]
  %s4 = inlined_call_operand.vmem [shape: f32[1,8], index: 4, kind: input, shape index: {}]
  %s5 = inlined_call_operand.hbm [shape: f32[2,8], index: 5, kind: output, shape index: {}]
  %s6 = sld [smem:[#allocation0]]
  $region30: #{tpu_custom_call.1} parent=0
    _
  %s8 = ssub.s32 1, %s6
  %s9 = scalar_select 0, %s8, %s6
  $region1: #{tpu_custom_call.1} parent=0
    #allocation2 [shape = 'u8[1024]{0}', space=vmem, size = 0x400, scoped, tag = 'output window, operand 0, single buffered']
    #allocation3 [shape = 's32[1]{0}', space=sflag, size = 0x4, scoped, tag = 'scoped memory for tpu_custom_call.1']
    %10 = vsyncpa [#allocation3], 0
    // Predicated region
    $region2: #{tpu_custom_call.1} parent=1 // pred_check
      _
    $region3: #{tpu_custom_call.1} parent=1 // pred_check_branch
      %12 = sbr.rel (0) target = $region5
    $region4: #{tpu_custom_call.1} parent=1 // pred_region
      _
    $region5: #{tpu_custom_call.1} parent=1 // pred_fallthru
      _
    // Predicated region
    $region6: #{tpu_custom_call.1} parent=1 // pred_check
      _
    $region7: #{tpu_custom_call.1} parent=1 // pred_check_branch
      %14 = sbr.rel (0) target = $region9
    $region8: #{tpu_custom_call.1} parent=1 // pred_region
      _
    $region9: #{tpu_custom_call.1} parent=1 // pred_fallthru
      _
    // Predicated region
    $region10: #{tpu_custom_call.1} parent=1 // pred_check
      _
    $region11: #{tpu_custom_call.1} parent=1 // pred_check_branch
      %16 = sbr.rel (0) target = $region13
    $region12: #{tpu_custom_call.1} parent=1 // pred_region
      _
    $region13: #{tpu_custom_call.1} parent=1 // pred_fallthru
      _
    // Predicated region
    $region14: #{tpu_custom_call.1} parent=1 // pred_check
      _
    $region15: #{tpu_custom_call.1} parent=1 // pred_check_branch
      %18 = sbr.rel (0) target = $region17
    $region16: #{tpu_custom_call.1} parent=1 // pred_region
      _
    $region17: #{tpu_custom_call.1} parent=1 // pred_fallthru
      _
    // Predicated region
    $region18: #{tpu_custom_call.1} parent=1 // pred_check
      _
    $region19: #{tpu_custom_call.1} parent=1 // pred_check_branch
      %20 = sbr.rel (0) target = $region21
    $region20: #{tpu_custom_call.1} parent=1 // pred_region
      _
    $region21: #{tpu_custom_call.1} parent=1 // pred_fallthru
      _
    %v21 = vld [vmem:[%s0] sm:$0x3]
    %v22 = vld [vmem:[%s1] sm:$0xff]
    %v23 = vld [vmem:[%s2] sm:$0x1]
    %v25 = vlaneseq
    %v26 = vshrl.u32 %v25, 7
    %v27 = vsub.s32 0, %v26
    %v28 = vrot.slane %v23, %v27
    %vm30 = vcmask 64512
    %v32 = vsel %vm30, %v21, 0
    %34 = vmatprep.subr.mxu0 0.0
    %35 = vmatpush1.msra.mxu0 %v22
    %36 = vmatprep.subr.mxu0 0.0
    %37 = vmatpush1.msra.mxu0 0.0
    %38 = vmatprep.subr.mxu0 0.0
    %39 = vmatpush1.msra.mxu0 0.0
    %40 = vmatprep.subr.mxu0 0.0
    %41 = vmatpush1.msra.mxu0 0.0
    %42 = vmatprep.subr.mxu0 0.0
    %43 = vmatpush1.msra.mxu0 0.0
    %44 = vmatprep.subr.mxu0 0.0
    %45 = vmatpush1.msra.mxu0 0.0
    %46 = vmatprep.subr.mxu0 0.0
    %47 = vmatpush1.msra.mxu0 0.0
    %48 = vmatprep.subr.mxu0 0.0
    %49 = vmatpush1.msra.mxu0 0.0
    %50 = vmatprep.subr.mxu0 0.0
    %51 = vmatpush1.msra.mxu0 0.0
    %52 = vmatprep.subr.mxu0 0.0
    %53 = vmatpush1.msra.mxu0 0.0
    %54 = vmatprep.subr.mxu0 0.0
    %55 = vmatpush1.msra.mxu0 0.0
    %56 = vmatprep.subr.mxu0 0.0
    %57 = vmatpush1.msra.mxu0 0.0
    %58 = vmatprep.subr.mxu0 0.0
    %59 = vmatpush1.msra.mxu0 0.0
    %60 = vmatprep.subr.mxu0 0.0
    %61 = vmatpush1.msra.mxu0 0.0
    %62 = vmatprep.subr.mxu0 0.0
    %63 = vmatpush1.msra.mxu0 0.0
    %64 = vmatprep.subr.mxu0 0.0
    %65 = vmatpush1.msra.mxu0 0.0
    %66 = vmatprep.subr.mxu0 0.0
    %67 = vmatpush1.msra.mxu0 0.0
    %68 = vmatprep.subr.mxu0 0.0
    %69 = vmatpush1.msra.mxu0 0.0
    %70 = vmatprep.subr.mxu0 0.0
    %71 = vmatpush1.msra.mxu0 0.0
    %72 = vmatprep.subr.mxu0 0.0
    %73 = vmatpush1.msra.mxu0 0.0
    %74 = vmatprep.subr.mxu0 0.0
    %75 = vmatpush1.msra.mxu0 0.0
    %76 = vmatprep.subr.mxu0 0.0
    %77 = vmatpush1.msra.mxu0 0.0
    %78 = vmatprep.subr.mxu0 0.0
    %79 = vmatpush1.msra.mxu0 0.0
    %80 = vmatprep.subr.mxu0 0.0
    %81 = vmatpush1.msra.mxu0 0.0
    %82 = vmatprep.subr.mxu0 0.0
    %83 = vmatpush1.msra.mxu0 0.0
    %84 = vmatprep.subr.mxu0 0.0
    %85 = vmatpush1.msra.mxu0 0.0
    %86 = vmatprep.subr.mxu0 0.0
    %87 = vmatpush1.msra.mxu0 0.0
    %88 = vmatprep.subr.mxu0 0.0
    %89 = vmatpush1.msra.mxu0 0.0
    %90 = vmatprep.subr.mxu0 0.0
    %91 = vmatpush1.msra.mxu0 0.0
    %92 = vmatprep.subr.mxu0 0.0
    %93 = vmatpush1.msra.mxu0 0.0
    %94 = vmatprep.subr.mxu0 0.0
    %95 = vmatpush1.msra.mxu0 0.0
    %96 = vmatprep.subr.mxu0 0.0
    %97 = vmatpush1.msra.mxu0 0.0
    %98 = vmatprep.mubr.f32.mxu0 0.0
    %99 = vmatmul.mubr.f32.gmra.mrb[0].mxu0 %v32
    %v100 = vpop.f32.mrb[0].mxu0
    %v101 = vadd.f32 %v28, %v100
    %v102 = vpop.f32.mrb[0].mxu0
    %103 = vdwg.mxu0
    %v104 = vmax.f32 %v101, 0.0
    %v105 = vld [vmem:[%s3] sm:$0xf]
    %v106 = vld [vmem:[%s4] sm:$0x1]
    %v108 = vlaneseq
    %v109 = vshrl.u32 %v108, 7
    %v110 = vsub.s32 0, %v109
    %v111 = vrot.slane %v106, %v110
    %vm113 = vcmask 31744
    %v115 = vsel %vm113, %v104, 0
    %vm117 = vcmask 1043456
    %v119 = vsel %vm117, %v105, 0
    %121 = vmatprep.subr.mxu0 0.0
    %122 = vmatpush1.msra.mxu0 %v119
    %123 = vmatprep.subr.mxu0 0.0
    %124 = vmatpush1.msra.mxu0 0.0
    %125 = vmatprep.subr.mxu0 0.0
    %126 = vmatpush1.msra.mxu0 0.0
    %127 = vmatprep.subr.mxu0 0.0
    %128 = vmatpush1.msra.mxu0 0.0
    %129 = vmatprep.subr.mxu0 0.0
    %130 = vmatpush1.msra.mxu0 0.0
    %131 = vmatprep.subr.mxu0 0.0
    %132 = vmatpush1.msra.mxu0 0.0
    %133 = vmatprep.subr.mxu0 0.0
    %134 = vmatpush1.msra.mxu0 0.0
    %135 = vmatprep.subr.mxu0 0.0
    %136 = vmatpush1.msra.mxu0 0.0
    %137 = vmatprep.subr.mxu0 0.0
    %138 = vmatpush1.msra.mxu0 0.0
    %139 = vmatprep.subr.mxu0 0.0
    %140 = vmatpush1.msra.mxu0 0.0
    %141 = vmatprep.subr.mxu0 0.0
    %142 = vmatpush1.msra.mxu0 0.0
    %143 = vmatprep.subr.mxu0 0.0
    %144 = vmatpush1.msra.mxu0 0.0
    %145 = vmatprep.subr.mxu0 0.0
    %146 = vmatpush1.msra.mxu0 0.0
    %147 = vmatprep.subr.mxu0 0.0
    %148 = vmatpush1.msra.mxu0 0.0
    %149 = vmatprep.subr.mxu0 0.0
    %150 = vmatpush1.msra.mxu0 0.0
    %151 = vmatprep.subr.mxu0 0.0
    %152 = vmatpush1.msra.mxu0 0.0
    %153 = vmatprep.subr.mxu0 0.0
    %154 = vmatpush1.msra.mxu0 0.0
    %155 = vmatprep.subr.mxu0 0.0
    %156 = vmatpush1.msra.mxu0 0.0
    %157 = vmatprep.subr.mxu0 0.0
    %158 = vmatpush1.msra.mxu0 0.0
    %159 = vmatprep.subr.mxu0 0.0
    %160 = vmatpush1.msra.mxu0 0.0
    %161 = vmatprep.subr.mxu0 0.0
    %162 = vmatpush1.msra.mxu0 0.0
    %163 = vmatprep.subr.mxu0 0.0
    %164 = vmatpush1.msra.mxu0 0.0
    %165 = vmatprep.subr.mxu0 0.0
    %166 = vmatpush1.msra.mxu0 0.0
    %167 = vmatprep.subr.mxu0 0.0
    %168 = vmatpush1.msra.mxu0 0.0
    %169 = vmatprep.subr.mxu0 0.0
    %170 = vmatpush1.msra.mxu0 0.0
    %171 = vmatprep.subr.mxu0 0.0
    %172 = vmatpush1.msra.mxu0 0.0
    %173 = vmatprep.subr.mxu0 0.0
    %174 = vmatpush1.msra.mxu0 0.0
    %175 = vmatprep.subr.mxu0 0.0
    %176 = vmatpush1.msra.mxu0 0.0
    %177 = vmatprep.subr.mxu0 0.0
    %178 = vmatpush1.msra.mxu0 0.0
    %179 = vmatprep.subr.mxu0 0.0
    %180 = vmatpush1.msra.mxu0 0.0
    %181 = vmatprep.subr.mxu0 0.0
    %182 = vmatpush1.msra.mxu0 0.0
    %183 = vmatprep.subr.mxu0 0.0
    %184 = vmatpush1.msra.mxu0 0.0
    %185 = vmatprep.mubr.f32.mxu0 0.0
    %186 = vmatmul.mubr.f32.gmra.mrb[0].mxu0 %v115
    %v187 = vpop.f32.mrb[0].mxu0
    %v188 = vadd.f32 %v111, %v187
    %v189 = vpop.f32.mrb[0].mxu0
    %190 = vdwg.mxu0
    %v191 = vxor.u32 %v188, 2147483648
    %v192 = vmul.f32 %v191, 1.442695
    %v193 = vpow.pop %v192
    %v194 = vadd.f32 %v193, 1.0
    %v195 = vrcp.pop %v194
    %v196 = vmul.f32 1.0, %v195
    %vm197 = vcmask 58368
    %198 = vst.msk [vmem:[#allocation2] sm:$0x3] %vm197, %v196
    // Predicated region
    $region22: #{tpu_custom_call.1} parent=1 // pred_check
      _
    $region23: #{tpu_custom_call.1} parent=1 // pred_check_branch
      %200 = sbr.rel (0) target = $region25
    $region24: #{tpu_custom_call.1} parent=1 // pred_region
      %s202 = ssub.s32 32, 32
      %203 = vsyncadd [#allocation3], %s202
      %s205 = sshll.u32 [#allocation2], 4
      %s206 = int_to_ptr.vmem [resolvable:$true] %s205
      %208 = dma.vmem_to_hbm [thread:$0]  %s206, 32, %s5, [#allocation3]
    $region25: #{tpu_custom_call.1} parent=1 // pred_fallthru
      _
    // Predicated region
    $region26: #{tpu_custom_call.1} parent=1 // pred_check
      _
    $region27: #{tpu_custom_call.1} parent=1 // pred_check_branch
      %210 = sbr.rel (0) target = $region29
    $region28: #{tpu_custom_call.1} parent=1 // pred_region
      %211 = dma.done [#allocation3], 32
    $region29: #{tpu_custom_call.1} parent=1 // pred_fallthru
      _
    %212 = vsyncpa [#allocation3], 1

</llo_original>
